<compile_context>
chip_gen: v7x
topology: tpu7x:2x2x1
jax: 0.10.0
libtpu: 0.0.40
codegen_flags: <defaults>
</compile_context>

<pallas_src>
import functools
import math

import jax
import jax.numpy as jnp
from jax import lax
from jax.experimental import pallas as pl
from jax.experimental.pallas import tpu as pltpu

# Large finite negative mask value: avoids exp(-inf - (-inf)) NaNs while still
# producing exactly-zero attention weights after the softmax.
_MASK_VALUE = -1e30


def _round_up(a: int, b: int) -> int:
    return (a + b - 1) // b * b


# --------------------------------------------------------------------------
# Kernel 1: fused Q/K/V projection (Q pre-scaled by C**-0.5).
# --------------------------------------------------------------------------
def _proj_kernel(x_ref, w_ref, q_ref, k_ref, v_ref, *, scale: float):
    # x_ref: (1, bt, C), w_ref: (3, C, Hs), outputs: (1, bt, Hs)
    x = x_ref[0]
    q_ref[0] = (jnp.dot(x, w_ref[0], preferred_element_type=jnp.float32)
                * scale).astype(q_ref.dtype)
    k_ref[0] = jnp.dot(x, w_ref[1],
                       preferred_element_type=jnp.float32).astype(k_ref.dtype)
    v_ref[0] = jnp.dot(x, w_ref[2],
                       preferred_element_type=jnp.float32).astype(v_ref.dtype)


def _project_qkv(x, w, *, scale, block_t, compute_dtype):
    B, T, C = x.shape
    Hs = w.shape[-1]
    nt = T // block_t
    out_sds = jax.ShapeDtypeStruct((B, T, Hs), compute_dtype)
    qkv_spec = pl.BlockSpec((1, block_t, Hs), lambda b, t: (b, t, 0))
    return pl.pallas_call(
        functools.partial(_proj_kernel, scale=scale),
        out_shape=(out_sds, out_sds, out_sds),
        grid_spec=pltpu.PrefetchScalarGridSpec(
            num_scalar_prefetch=0,
            grid=(B, nt),
            in_specs=[
                pl.BlockSpec((1, block_t, C), lambda b, t: (b, t, 0)),  # x tile
                pl.BlockSpec((3, C, Hs), lambda b, t: (0, 0, 0)),       # weights
            ],
            out_specs=[qkv_spec, qkv_spec, qkv_spec],
        ),
        compiler_params=pltpu.CompilerParams(
            dimension_semantics=("parallel", "parallel")),
    )(x, w)


# --------------------------------------------------------------------------
# Kernel 2: flash-style attention over precomputed Q, K, V.
# --------------------------------------------------------------------------
def _attn_kernel(q_ref, k_ref, v_ref, o_ref,
                 m_scr, l_scr, acc_scr,
                 *, encoder: bool, block_q: int, block_k: int,
                 seq_len: int, padded: bool, compute_dtype):
    # q_ref: (1, bq, Hs) (resident across ki), k_ref/v_ref: (1, bk, Hs)
    qi = pl.program_id(1)
    ki = pl.program_id(2)
    nk = pl.num_programs(2)

    @pl.when(ki == 0)
    def _init():
        m_scr[...] = jnp.full(m_scr.shape, _MASK_VALUE, jnp.float32)
        l_scr[...] = jnp.zeros(l_scr.shape, jnp.float32)
        acc_scr[...] = jnp.zeros(acc_scr.shape, jnp.float32)

    def _scores():
        # q @ k^T without materializing a transpose (contract the head dim).
        return lax.dot_general(
            q_ref[0], k_ref[0],
            dimension_numbers=(((1,), (1,)), ((), ())),
            preferred_element_type=jnp.float32)              # (bq, bk)

    def _update(s):
        m_prev = m_scr[...]
        m_new = jnp.maximum(m_prev, jnp.max(s, axis=-1, keepdims=True))
        alpha = jnp.exp(m_prev - m_new)
        p = jnp.exp(s - m_new)
        l_scr[...] = alpha * l_scr[...] + jnp.sum(p, axis=-1, keepdims=True)
        acc_scr[...] = alpha * acc_scr[...] + jnp.dot(
            p.astype(compute_dtype), v_ref[0],
            preferred_element_type=jnp.float32)
        m_scr[...] = m_new

    if encoder:
        s = _scores()
        if padded:
            # Mask padded key columns (only compiled in when padding exists).
            col = ki * block_k + lax.broadcasted_iota(
                jnp.int32, (block_q, block_k), 1)
            s = jnp.where(col < seq_len, s, _MASK_VALUE)
        _update(s)
    else:
        q_start = qi * block_q
        k_start = ki * block_k
        # Tile entirely below the diagonal: no element needs masking.
        full_below = k_start + block_k <= q_start + 1
        # Tile has at least one valid (row >= col) element.
        has_valid = k_start < q_start + block_q

        @pl.when(full_below)
        def _fast():                       # no iota/compare/select on this path
            _update(_scores())

        @pl.when(has_valid & jnp.logical_not(full_below))
        def _diag():                       # diagonal-straddling tiles only
            s = _scores()
            row = q_start + lax.broadcasted_iota(jnp.int32, (block_q, block_k), 0)
            col = k_start + lax.broadcasted_iota(jnp.int32, (block_q, block_k), 1)
            # Causal mask; also masks padded cols (col >= seq_len > row) for
            # every valid query row.
            s = jnp.where(row >= col, s, _MASK_VALUE)
            _update(s)

    @pl.when(ki == nk - 1)
    def _finalize():
        inv_l = pl.reciprocal(l_scr[...], approx=False)   # once per q-tile: free
        o_ref[0] = (acc_scr[...] * inv_l).astype(o_ref.dtype)


# --------------------------------------------------------------------------
# Wrapper.
# --------------------------------------------------------------------------
def head_forward(x, wk, wq, wv, *, encoder: bool = False,
                 compute_dtype=jnp.bfloat16,
                 block_q: int = 256, block_k: int = 256):
    """Single attention head. x: (B, T, C); wk/wq/wv: (head_size, C)."""
    B, T, C = x.shape
    Hs = wk.shape[0]

    # Sublane-aligned tile sizes; pad T instead of silently using blk = T.
    bq = min(block_q, _round_up(T, 8))
    bk = min(block_k, _round_up(T, 8))
    T_pad = _round_up(T, math.lcm(bq, bk))
    padded = T_pad != T

    # Pre-transpose & stack projection weights: (3, C, Hs).  Wrapper-side layout
    # plumbing is free and avoids any in-kernel transposes.
    w = jnp.stack([wq.T, wk.T, wv.T], axis=0).astype(compute_dtype)
    x_c = x.astype(compute_dtype)
    if padded:
        x_c = jnp.pad(x_c, ((0, 0), (0, T_pad - T), (0, 0)))

    scale = float(C) ** -0.5   # PyTorch module scales by embedding dim C

    # Q/K/V computed exactly once (Q pre-scaled) -> (B, T_pad, Hs) bf16.
    q, k, v = _project_qkv(x_c, w, scale=scale, block_t=bq,
                           compute_dtype=compute_dtype)

    nq, nk = T_pad // bq, T_pad // bk

    if encoder:
        kv_index_map = lambda b, qi, ki: (b, ki, 0)
    else:
        # Clamp kv block index past the causal diagonal: the block index stops
        # changing, so Pallas issues no DMA for tiles whose compute is skipped.
        def kv_index_map(b, qi, ki):
            last_valid = ((qi + 1) * bq - 1) // bk
            return (b, jnp.minimum(ki, last_valid), 0)

    kernel = functools.partial(
        _attn_kernel,
        encoder=encoder, block_q=bq, block_k=bk,
        seq_len=T, padded=padded, compute_dtype=compute_dtype)

    out = pl.pallas_call(
        kernel,
        out_shape=jax.ShapeDtypeStruct((B, T_pad, Hs), x.dtype),
        grid_spec=pltpu.PrefetchScalarGridSpec(
            num_scalar_prefetch=0,
            grid=(B, nq, nk),
            in_specs=[
                pl.BlockSpec((1, bq, Hs), lambda b, qi, ki: (b, qi, 0)),  # Q
                pl.BlockSpec((1, bk, Hs), kv_index_map),                  # K
                pl.BlockSpec((1, bk, Hs), kv_index_map),                  # V
            ],
            out_specs=pl.BlockSpec((1, bq, Hs), lambda b, qi, ki: (b, qi, 0)),
            scratch_shapes=[
                pltpu.VMEM((bq, 1), jnp.float32),    # running row max
                pltpu.VMEM((bq, 1), jnp.float32),    # running softmax denom
                pltpu.VMEM((bq, Hs), jnp.float32),   # output accumulator
            ],
        ),
        compiler_params=pltpu.CompilerParams(
            dimension_semantics=("parallel", "parallel", "arbitrary")),
    )(q, k, v)

    if padded:
        out = out[:, :T, :]
    return out


def head_reference(x, wk, wq, wv, *, encoder: bool = False):
    """Pure-JAX reference mirroring the PyTorch forward (dropout in eval mode)."""
    B, T, C = x.shape
    k = x @ wk.T
    q = x @ wq.T
    v = x @ wv.T
    w = (q @ jnp.swapaxes(k, -2, -1)) * (C ** -0.5)
    if not encoder:
        tril = jnp.tril(jnp.ones((T, T), dtype=bool))
        w = jnp.where(tril, w, -jnp.inf)
    w = jax.nn.softmax(w, axis=-1)
    return w @ v


if __name__ == "__main__":
    # Small shapes consistent with the module's forward: (B, T, C), head_size Hs.
    B, T, C, Hs = 2, 32, 64, 16

    key = jax.random.PRNGKey(0)
    kx, kk, kq, kv = jax.random.split(key, 4)

    x = jax.random.normal(kx, (B, T, C), dtype=jnp.float32)
    # nn.Linear(n_embed, head_size, bias=False) weights: (head_size, n_embed)
    s = 1.0 / jnp.sqrt(jnp.float32(C))
    wk = jax.random.uniform(kk, (Hs, C), jnp.float32, -s, s)
    wq = jax.random.uniform(kq, (Hs, C), jnp.float32, -s, s)
    wv = jax.random.uniform(kv, (Hs, C), jnp.float32, -s, s)

    # Decoder (causal): exercises multi-tile path, diagonal/below-diagonal split
    # and the clamped kv index_map (DMA skipping above the diagonal).
    out_dec = jax.block_until_ready(
        head_forward(x, wk, wq, wv, encoder=False, block_q=16, block_k=16))
    ref_dec = head_reference(x, wk, wq, wv, encoder=False)
    assert out_dec.shape == (B, T, Hs)
    # bf16 MXU inputs => looser tolerance vs. f32 reference.
    assert jnp.allclose(out_dec, ref_dec, atol=3e-2, rtol=3e-2), "decoder mismatch"

    # Encoder (no mask).
    out_enc = jax.block_until_ready(
        head_forward(x, wk, wq, wv, encoder=True, block_q=16, block_k=16))
    ref_enc = head_reference(x, wk, wq, wv, encoder=True)
    assert jnp.allclose(out_enc, ref_enc, atol=3e-2, rtol=3e-2), "encoder mismatch"

    # Non-divisible T: exercises the padding path (no blk=T fallback).
    T2 = 40
    x2 = jax.random.normal(kx, (B, T2, C), dtype=jnp.float32)
    for enc in (False, True):
        out2 = jax.block_until_ready(
            head_forward(x2, wk, wq, wv, encoder=enc, block_q=16, block_k=16))
        ref2 = head_reference(x2, wk, wq, wv, encoder=enc)
        assert out2.shape == (B, T2, Hs)
        assert jnp.allclose(out2, ref2, atol=3e-2, rtol=3e-2), (
            f"padded mismatch (encoder={enc})")

    print("KERNEL_OK")
</pallas_src>

<mosaic_0001>
module attributes {stable_mosaic.version = 11 : i64} {
  func.func @_proj_kernel(%arg0: i32, %arg1: i32, %arg2: memref<1x16x64xbf16, #tpu.memory_space<vmem>>, %arg3: memref<3x64x16xbf16, #tpu.memory_space<vmem>>, %arg4: memref<1x16x16xbf16, #tpu.memory_space<vmem>>, %arg5: memref<1x16x16xbf16, #tpu.memory_space<vmem>>, %arg6: memref<1x16x16xbf16, #tpu.memory_space<vmem>>) attributes {dimension_semantics = [#tpu.dimension_semantics<parallel>, #tpu.dimension_semantics<parallel>], iteration_bounds = array<i64: 2, 2>, scalar_prefetch = 0 : i64, scratch_operands = 0 : i64, tpu.core_type = #tpu.core_type<tc>, window_params = [{transform_indices = @transform_0, window_bounds = array<i64: 1, 16, 64>}, {pipeline_mode = #tpu.pipeline_mode<synchronous>, transform_indices = @transform_1, window_bounds = array<i64: 3, 64, 16>}, {transform_indices = @transform_2, window_bounds = array<i64: 1, 16, 16>}, {transform_indices = @transform_3, window_bounds = array<i64: 1, 16, 16>}, {transform_indices = @transform_4, window_bounds = array<i64: 1, 16, 16>}]} {
    %c0 = arith.constant 0 : index
    %c0_0 = arith.constant 0 : index
    %c0_1 = arith.constant 0 : index
    %0 = vector.load %arg2[%c0, %c0_0, %c0_1] : memref<1x16x64xbf16, #tpu.memory_space<vmem>>, vector<1x16x64xbf16>
    %1 = vector.shape_cast %0 : vector<1x16x64xbf16> to vector<16x64xbf16>
    %c0_2 = arith.constant 0 : index
    %c0_3 = arith.constant 0 : index
    %c0_4 = arith.constant 0 : index
    %2 = vector.load %arg3[%c0_2, %c0_3, %c0_4] : memref<3x64x16xbf16, #tpu.memory_space<vmem>>, vector<1x64x16xbf16>
    %3 = vector.shape_cast %2 : vector<1x64x16xbf16> to vector<64x16xbf16>
    %cst = arith.constant dense<0.000000e+00> : vector<16x16xf32>
    %4 = tpu.matmul %1, %3, %cst {dimension_numbers = #tpu.dot_dimension_numbers<[1], [0], [0], [1], [0, 0, 1, 1], [], []>} : vector<16x64xbf16>, vector<64x16xbf16>, vector<16x16xf32> -> vector<16x16xf32>
    %cst_5 = arith.constant 1.250000e-01 : f32
    %5 = vector.broadcast %cst_5 : f32 to vector<16x16xf32>
    %6 = arith.mulf %4, %5 : vector<16x16xf32>
    %7 = arith.truncf %6 : vector<16x16xf32> to vector<16x16xbf16>
    %c0_6 = arith.constant 0 : index
    %c0_7 = arith.constant 0 : index
    %c0_8 = arith.constant 0 : index
    %8 = vector.load %arg4[%c0_6, %c0_7, %c0_8] : memref<1x16x16xbf16, #tpu.memory_space<vmem>>, vector<1x16x16xbf16>
    %9 = vector.shape_cast %8 : vector<1x16x16xbf16> to vector<16x16xbf16>
    %10 = vector.shape_cast %7 : vector<16x16xbf16> to vector<1x16x16xbf16>
    tpu.vector_store %arg4[%c0_6, %c0_7, %c0_8], %10 {strides = array<i32>} : memref<1x16x16xbf16, #tpu.memory_space<vmem>>, vector<1x16x16xbf16>,
    %c1 = arith.constant 1 : index
    %c0_9 = arith.constant 0 : index
    %c0_10 = arith.constant 0 : index
    %11 = vector.load %arg3[%c1, %c0_9, %c0_10] : memref<3x64x16xbf16, #tpu.memory_space<vmem>>, vector<1x64x16xbf16>
    %12 = vector.shape_cast %11 : vector<1x64x16xbf16> to vector<64x16xbf16>
    %cst_11 = arith.constant dense<0.000000e+00> : vector<16x16xf32>
    %13 = tpu.matmul %1, %12, %cst_11 {dimension_numbers = #tpu.dot_dimension_numbers<[1], [0], [0], [1], [0, 0, 1, 1], [], []>} : vector<16x64xbf16>, vector<64x16xbf16>, vector<16x16xf32> -> vector<16x16xf32>
    %14 = arith.truncf %13 : vector<16x16xf32> to vector<16x16xbf16>
    %c0_12 = arith.constant 0 : index
    %c0_13 = arith.constant 0 : index
    %c0_14 = arith.constant 0 : index
    %15 = vector.load %arg5[%c0_12, %c0_13, %c0_14] : memref<1x16x16xbf16, #tpu.memory_space<vmem>>, vector<1x16x16xbf16>
    %16 = vector.shape_cast %15 : vector<1x16x16xbf16> to vector<16x16xbf16>
    %17 = vector.shape_cast %14 : vector<16x16xbf16> to vector<1x16x16xbf16>
    tpu.vector_store %arg5[%c0_12, %c0_13, %c0_14], %17 {strides = array<i32>} : memref<1x16x16xbf16, #tpu.memory_space<vmem>>, vector<1x16x16xbf16>,
    %c2 = arith.constant 2 : index
    %c0_15 = arith.constant 0 : index
    %c0_16 = arith.constant 0 : index
    %18 = vector.load %arg3[%c2, %c0_15, %c0_16] : memref<3x64x16xbf16, #tpu.memory_space<vmem>>, vector<1x64x16xbf16>
    %19 = vector.shape_cast %18 : vector<1x64x16xbf16> to vector<64x16xbf16>
    %cst_17 = arith.constant dense<0.000000e+00> : vector<16x16xf32>
    %20 = tpu.matmul %1, %19, %cst_17 {dimension_numbers = #tpu.dot_dimension_numbers<[1], [0], [0], [1], [0, 0, 1, 1], [], []>} : vector<16x64xbf16>, vector<64x16xbf16>, vector<16x16xf32> -> vector<16x16xf32>
    %21 = arith.truncf %20 : vector<16x16xf32> to vector<16x16xbf16>
    %c0_18 = arith.constant 0 : index
    %c0_19 = arith.constant 0 : index
    %c0_20 = arith.constant 0 : index
    %22 = vector.load %arg6[%c0_18, %c0_19, %c0_20] : memref<1x16x16xbf16, #tpu.memory_space<vmem>>, vector<1x16x16xbf16>
    %23 = vector.shape_cast %22 : vector<1x16x16xbf16> to vector<16x16xbf16>
    %24 = vector.shape_cast %21 : vector<16x16xbf16> to vector<1x16x16xbf16>
    tpu.vector_store %arg6[%c0_18, %c0_19, %c0_20], %24 {strides = array<i32>} : memref<1x16x16xbf16, #tpu.memory_space<vmem>>, vector<1x16x16xbf16>,
    return
  }
  func.func @transform_0(%arg0: i32, %arg1: i32) -> (i32, i32, i32) {
    %c0_i32 = arith.constant 0 : i32
    %c0_i32_0 = arith.constant 0 : i32
    return %arg0, %arg1, %c0_i32 : i32, i32, i32
  }
  func.func @transform_1(%arg0: i32, %arg1: i32) -> (i32, i32, i32) {
    %c0_i32 = arith.constant 0 : i32
    %c0_i32_0 = arith.constant 0 : i32
    %c0_i32_1 = arith.constant 0 : i32
    %c0_i32_2 = arith.constant 0 : i32
    return %c0_i32, %c0_i32_0, %c0_i32_1 : i32, i32, i32
  }
  func.func @transform_2(%arg0: i32, %arg1: i32) -> (i32, i32, i32) {
    %c0_i32 = arith.constant 0 : i32
    %c0_i32_0 = arith.constant 0 : i32
    return %arg0, %arg1, %c0_i32 : i32, i32, i32
  }
  func.func @transform_3(%arg0: i32, %arg1: i32) -> (i32, i32, i32) {
    %c0_i32 = arith.constant 0 : i32
    %c0_i32_0 = arith.constant 0 : i32
    return %arg0, %arg1, %c0_i32 : i32, i32, i32
  }
  func.func @transform_4(%arg0: i32, %arg1: i32) -> (i32, i32, i32) {
    %c0_i32 = arith.constant 0 : i32
    %c0_i32_0 = arith.constant 0 : i32
    return %arg0, %arg1, %c0_i32 : i32, i32, i32
  }
}

</mosaic_0001>

<llo_original>
// kernel: tpu_custom_call.1
$region0: #{tpu_custom_call.1}
  #allocation0 [shape = 'u32[]', space=smem, size = 0x4, offset = 0x4, fixed_abs, tag = 'smem constant byte address 0x4 - core index']
  #allocation1 [shape = 'u32[144,128]{1,0:T(1,128)}', space=vmem, size = 0x12000, scoped, tag = 'internal scratch']
  %s0 = inlined_call_operand.vmem [shape: bf16[2,32,64], index: 0, kind: input, shape index: {}]
  %s1 = inlined_call_operand.vmem [shape: bf16[3,64,16], index: 1, kind: input, shape index: {}]
  %s2 = inlined_call_operand.vmem [shape: bf16[2,32,16], index: 2, kind: output, shape index: {0}]
  %s3 = inlined_call_operand.vmem [shape: bf16[2,32,16], index: 3, kind: output, shape index: {1}]
  %s4 = inlined_call_operand.vmem [shape: bf16[2,32,16], index: 4, kind: output, shape index: {2}]
  %5 = xla_tuple %s2, %s3, %s4
  %s6 = sld [smem:[#allocation0]]
  $region57: #{tpu_custom_call.1} parent=0
    _
  %s8 = ssub.s32 1, %s6
  %s9 = scalar_select 0, %s8, %s6
  loop: start=0, step=1, limit=6
  $region2: #{tpu_custom_call.1} parent=0 // loop_pre_header
    _
  $region3: #{tpu_custom_call.1} parent=0 // loop_header
    %s11 = sphi 0, %s15
    %p12 = scmp.ge.s32.totalorder %s11, 6
    %s18 = sphi 0, %s30
    %s19 = sphi 0, %s26
    %s20 = sphi 0, %s18
    %s21 = sphi 0, %s19
    %s22 = sphi 0, %s20
    %s23 = sphi 0, %s21
    %s35 = sphi 0, %s37
    %s38 = sphi 0, %s35
    %s39 = sphi 0, %s38
    %s55 = sphi 0, %s39
    %s59 = sphi 0, %s59
    %s61 = sphi 0, %s59
    %s62 = sphi 0, %s61
    %s76 = sphi 0, %s62
    %s84 = sphi 0, %s86
    %s87 = sphi 0, %s84
    %s88 = sphi 0, %s87
    %s104 = sphi 0, %s88
    %s112 = sphi 0, %s114
    %s115 = sphi 0, %s112
    %s116 = sphi 0, %s115
    %s132 = sphi 0, %s116
    %s140 = sphi 0, %s142
    %s143 = sphi 0, %s140
    %s144 = sphi 0, %s143
    %s160 = sphi 0, %s144
  $region4: #{tpu_custom_call.1} parent=0 // loop_header_branch
    %14 = sbr.rel (%p12) target = $region8
  $region5: #{tpu_custom_call.1} parent=0 // loop_body
    %s16 = ssub.s32 %s11, 1
    %s17 = ssub.s32 %s11, 2
    %s24 = sadd.s32 1, %s19
    %p25 = scmp.ge.s32.totalorder %s24, 2
    %s26 = scalar_select %p25, 0, %s24
    %s27 = sadd.s32 1, %s18
    %s28 = scalar_select %p25, %s27, %s18
    %p29 = scmp.ge.s32.totalorder %s28, 2
    %s30 = scalar_select %p29, 0, %s28
    %s31 = ssub.s32 %s18, %s30
    %s32 = ssub.s32 %s19, %s26
    %s33 = sor.u32 %s31, %s32
    %p34 = scmp.eq.s32.totalorder %s33, 0
    %s36 = sadd.s32 %s35, 1
    %s37 = scalar_select %p34, %s35, %s36
    %p40 = pneg %p34
    %p41 = scmp.eq.s32.totalorder %s11, 3
    %p42 = por %p40, %p41
    %p43 = scmp.ne.s32.totalorder %s35, %s38
    %p44 = scmp.eq.s32.totalorder %s11, 0
    %p45 = por %p43, %p44
    %p46 = scmp.ne.s32.totalorder %s35, %s38
    %p47 = scmp.eq.s32.totalorder %s16, 3
    %p48 = por %p46, %p47
    %p49 = scmp.ne.s32.totalorder %s38, %s39
    %p50 = scmp.eq.s32.totalorder %s16, 0
    %p51 = por %p49, %p50
    %p52 = scmp.ne.s32.totalorder %s38, %s39
    %p53 = scmp.eq.s32.totalorder %s17, 3
    %p54 = por %p52, %p53
    %p56 = scmp.ne.s32.totalorder %s39, %s55
    %p57 = scmp.eq.s32.totalorder %s17, 0
    %p58 = por %p56, %p57
    %s60 = sadd.s32 %s59, 1
    %p63 = scmp.eq.s32.totalorder %s11, 3
    %p64 = scmp.ne.s32.totalorder %s59, %s61
    %p65 = scmp.eq.s32.totalorder %s11, 0
    %p66 = por %p64, %p65
    %p67 = scmp.ne.s32.totalorder %s59, %s61
    %p68 = scmp.eq.s32.totalorder %s16, 3
    %p69 = por %p67, %p68
    %p70 = scmp.ne.s32.totalorder %s61, %s62
    %p71 = scmp.eq.s32.totalorder %s16, 0
    %p72 = por %p70, %p71
    %p73 = scmp.ne.s32.totalorder %s61, %s62
    %p74 = scmp.eq.s32.totalorder %s17, 3
    %p75 = por %p73, %p74
    %p77 = scmp.ne.s32.totalorder %s62, %s76
    %p78 = scmp.eq.s32.totalorder %s17, 0
    %p79 = por %p77, %p78
    %s80 = ssub.s32 %s18, %s30
    %s81 = ssub.s32 %s19, %s26
    %s82 = sor.u32 %s80, %s81
    %p83 = scmp.eq.s32.totalorder %s82, 0
    %s85 = sadd.s32 %s84, 1
    %s86 = scalar_select %p83, %s84, %s85
    %p89 = pneg %p83
    %p90 = scmp.eq.s32.totalorder %s11, 3
    %p91 = por %p89, %p90
    %p92 = scmp.ne.s32.totalorder %s84, %s87
    %p93 = scmp.eq.s32.totalorder %s11, 0
    %p94 = por %p92, %p93
    %p95 = scmp.ne.s32.totalorder %s84, %s87
    %p96 = scmp.eq.s32.totalorder %s16, 3
    %p97 = por %p95, %p96
    %p98 = scmp.ne.s32.totalorder %s87, %s88
    %p99 = scmp.eq.s32.totalorder %s16, 0
    %p100 = por %p98, %p99
    %p101 = scmp.ne.s32.totalorder %s87, %s88
    %p102 = scmp.eq.s32.totalorder %s17, 3
    %p103 = por %p101, %p102
    %p105 = scmp.ne.s32.totalorder %s88, %s104
    %p106 = scmp.eq.s32.totalorder %s17, 0
    %p107 = por %p105, %p106
    %s108 = ssub.s32 %s18, %s30
    %s109 = ssub.s32 %s19, %s26
    %s110 = sor.u32 %s108, %s109
    %p111 = scmp.eq.s32.totalorder %s110, 0
    %s113 = sadd.s32 %s112, 1
    %s114 = scalar_select %p111, %s112, %s113
    %p117 = pneg %p111
    %p118 = scmp.eq.s32.totalorder %s11, 3
    %p119 = por %p117, %p118
    %p120 = scmp.ne.s32.totalorder %s112, %s115
    %p121 = scmp.eq.s32.totalorder %s11, 0
    %p122 = por %p120, %p121
    %p123 = scmp.ne.s32.totalorder %s112, %s115
    %p124 = scmp.eq.s32.totalorder %s16, 3
    %p125 = por %p123, %p124
    %p126 = scmp.ne.s32.totalorder %s115, %s116
    %p127 = scmp.eq.s32.totalorder %s16, 0
    %p128 = por %p126, %p127
    %p129 = scmp.ne.s32.totalorder %s115, %s116
    %p130 = scmp.eq.s32.totalorder %s17, 3
    %p131 = por %p129, %p130
    %p133 = scmp.ne.s32.totalorder %s116, %s132
    %p134 = scmp.eq.s32.totalorder %s17, 0
    %p135 = por %p133, %p134
    %s136 = ssub.s32 %s18, %s30
    %s137 = ssub.s32 %s19, %s26
    %s138 = sor.u32 %s136, %s137
    %p139 = scmp.eq.s32.totalorder %s138, 0
    %s141 = sadd.s32 %s140, 1
    %s142 = scalar_select %p139, %s140, %s141
    %p145 = pneg %p139
    %p146 = scmp.eq.s32.totalorder %s11, 3
    %p147 = por %p145, %p146
    %p148 = scmp.ne.s32.totalorder %s140, %s143
    %p149 = scmp.eq.s32.totalorder %s11, 0
    %p150 = por %p148, %p149
    %p151 = scmp.ne.s32.totalorder %s140, %s143
    %p152 = scmp.eq.s32.totalorder %s16, 3
    %p153 = por %p151, %p152
    %p154 = scmp.ne.s32.totalorder %s143, %s144
    %p155 = scmp.eq.s32.totalorder %s16, 0
    %p156 = por %p154, %p155
    %p157 = scmp.ne.s32.totalorder %s143, %s144
    %p158 = scmp.eq.s32.totalorder %s17, 3
    %p159 = por %p157, %p158
    %p161 = scmp.ne.s32.totalorder %s144, %s160
    %p162 = scmp.eq.s32.totalorder %s17, 0
    %p163 = por %p161, %p162
    %p164 = scmp.le.s32.totalorder 1, %s11
    %p165 = scmp.lt.s32.totalorder %s11, 5
    %p166 = pnand %p164, %p165
    %p167 = pneg %p166
    // Predicated region
    $region9: #{tpu_custom_call.1} parent=5 // pred_check
      _
    $region10: #{tpu_custom_call.1} parent=5 // pred_check_branch
      %169 = sbr.rel (%p166) target = $region12
    $region11: #{tpu_custom_call.1} parent=5 // pred_region
      %s170 = ssub.s32 %s11, 1
      // Predicated region
      $region13: #{tpu_custom_call.1} parent=11 // pred_check
        %p171 = pneg %p72
      $region14: #{tpu_custom_call.1} parent=11 // pred_check_branch
        %173 = sbr.rel (%p171) target = $region16
      $region15: #{tpu_custom_call.1} parent=11 // pred_region
        _
      $region16: #{tpu_custom_call.1} parent=11 // pred_fallthru
        _
    $region12: #{tpu_custom_call.1} parent=5 // pred_fallthru
      _
    %p174 = scmp.lt.s32.totalorder %s11, 4
    // Predicated region
    $region17: #{tpu_custom_call.1} parent=5 // pred_check
      %p175 = pneg %p174
    $region18: #{tpu_custom_call.1} parent=5 // pred_check_branch
      %177 = sbr.rel (%p175) target = $region20
    $region19: #{tpu_custom_call.1} parent=5 // pred_region
      // Predicated region
      $region21: #{tpu_custom_call.1} parent=19 // pred_check
        %p178 = pneg %p45
      $region22: #{tpu_custom_call.1} parent=19 // pred_check_branch
        %180 = sbr.rel (%p178) target = $region24
      $region23: #{tpu_custom_call.1} parent=19 // pred_region
        %s181 = smul.u32 2, %s19
        %p182 = scmp.lt.s32.totalorder %s18, 1
        %s183 = scalar_select %p182, %s18, 1
        %p184 = scmp.lt.s32.totalorder %s181, 3
        %s185 = scalar_select %p184, %s181, 3
        %s186 = smul.addr %s183, 4
        %s187 = sadd.s32 %s185, %s186
        %s188 = smul.addr %s187, 4
        %s189 = scalar_lea.vmem %s0, %s188
        %s190 = smul.u32 2, %s19
      $region24: #{tpu_custom_call.1} parent=19 // pred_fallthru
        _
    $region20: #{tpu_custom_call.1} parent=5 // pred_fallthru
      _
    %p191 = scmp.le.s32.totalorder 1, %s11
    %p192 = scmp.lt.s32.totalorder %s11, 5
    %p193 = pnand %p191, %p192
    %p194 = pneg %p193
    // Predicated region
    $region25: #{tpu_custom_call.1} parent=5 // pred_check
      _
    $region26: #{tpu_custom_call.1} parent=5 // pred_check_branch
      %196 = sbr.rel (%p193) target = $region28
    $region27: #{tpu_custom_call.1} parent=5 // pred_region
      %s197 = ssub.s32 %s11, 1
      %s198 = smul.u32 2, %s21
      %p199 = scmp.lt.s32.totalorder %s20, 1
      %s200 = scalar_select %p199, %s20, 1
      %p201 = scmp.lt.s32.totalorder %s198, 3
      %s202 = scalar_select %p201, %s198, 3
      %s203 = smul.addr %s200, 4
      %s204 = sadd.s32 %s202, %s203
      %s205 = smul.addr %s204, 4
      %s206 = scalar_lea.vmem %s0, %s205
      %p207 = pneg %p51
      %p208 = pneg %p48
      %p209 = pneg %p72
      %p210 = pneg %p69
      %p211 = pneg %p100
      %p212 = pneg %p97
      %s213 = smul.u32 2, %s21
      %p214 = scmp.lt.s32.totalorder %s20, 1
      %s215 = scalar_select %p214, %s20, 1
      %p216 = scmp.lt.s32.totalorder %s213, 3
      %s217 = scalar_select %p216, %s213, 3
      %s218 = smul.addr %s215, 4
      %s219 = sadd.s32 %s217, %s218
      %s220 = smul.addr %s219, 4
      %s221 = scalar_lea.vmem %s2, %s220
      %p222 = pneg %p128
      %p223 = pneg %p125
      %s224 = smul.u32 2, %s21
      %p225 = scmp.lt.s32.totalorder %s20, 1
      %s226 = scalar_select %p225, %s20, 1
      %p227 = scmp.lt.s32.totalorder %s224, 3
      %s228 = scalar_select %p227, %s224, 3
      %s229 = smul.addr %s226, 4
      %s230 = sadd.s32 %s228, %s229
      %s231 = smul.addr %s230, 4
      %s232 = scalar_lea.vmem %s3, %s231
      %p233 = pneg %p156
      %p234 = pneg %p153
      %s235 = smul.u32 2, %s21
      %p236 = scmp.lt.s32.totalorder %s20, 1
      %s237 = scalar_select %p236, %s20, 1
      %p238 = scmp.lt.s32.totalorder %s235, 3
      %s239 = scalar_select %p238, %s235, 3
      %s240 = smul.addr %s237, 4
      %s241 = sadd.s32 %s239, %s240
      %s242 = smul.addr %s241, 4
      %s243 = scalar_lea.vmem %s4, %s242
      %s244 = smul.u32 2, %s21
      %p245 = scmp.lt.s32.totalorder %s20, 1
      %s246 = scalar_select %p245, %s20, 1
      %p247 = scmp.lt.s32.totalorder %s244, 3
      %s248 = scalar_select %p247, %s244, 3
      %s249 = smul.addr %s246, 4
      %s250 = sadd.s32 %s248, %s249
      %s251 = smul.addr %s250, 4
      %s252 = scalar_lea.vmem %s0, %s251
      %s253 = smul.u32 2, %s21
      %s254 = smul.u32 2, %s21
      %p255 = scmp.lt.s32.totalorder %s20, 1
      %s256 = scalar_select %p255, %s20, 1
      %p257 = scmp.lt.s32.totalorder %s254, 3
      %s258 = scalar_select %p257, %s254, 3
      %s259 = smul.addr %s256, 4
      %s260 = sadd.s32 %s258, %s259
      %s261 = smul.addr %s260, 4
      %s262 = scalar_lea.vmem %s2, %s261
      %s263 = smul.u32 2, %s21
      %s264 = smul.u32 2, %s21
      %p265 = scmp.lt.s32.totalorder %s20, 1
      %s266 = scalar_select %p265, %s20, 1
      %p267 = scmp.lt.s32.totalorder %s264, 3
      %s268 = scalar_select %p267, %s264, 3
      %s269 = smul.addr %s266, 4
      %s270 = sadd.s32 %s268, %s269
      %s271 = smul.addr %s270, 4
      %s272 = scalar_lea.vmem %s3, %s271
      %s273 = smul.u32 2, %s21
      %s274 = smul.u32 2, %s21
      %p275 = scmp.lt.s32.totalorder %s20, 1
      %s276 = scalar_select %p275, %s20, 1
      %p277 = scmp.lt.s32.totalorder %s274, 3
      %s278 = scalar_select %p277, %s274, 3
      %s279 = smul.addr %s276, 4
      %s280 = sadd.s32 %s278, %s279
      %s281 = smul.addr %s280, 4
      %s282 = scalar_lea.vmem %s4, %s281
      %s283 = smul.u32 2, %s21
      %v285 = vld [vmem:[%s252] sm:$0xf]
      %v286 = vld [vmem:[%s252 + $0x4] sm:$0xf]
      %v287 = vld [vmem:[%s1] sm:$0xf]
      %v288 = vld [vmem:[%s1 + $0x4] sm:$0xf]
      %v289 = vld [vmem:[%s1 + $0x8] sm:$0xf]
      %v290 = vld [vmem:[%s1 + $0xc] sm:$0xf]
      %v291 = vld [vmem:[%s1 + $0x10] sm:$0xf]
      %v292 = vld [vmem:[%s1 + $0x14] sm:$0xf]
      %v293 = vld [vmem:[%s1 + $0x18] sm:$0xf]
      %v294 = vld [vmem:[%s1 + $0x1c] sm:$0xf]
      %v297 = vunpack.c.l.b16 %v285
      %v298 = vunpack.c.l.b16 %v286
      %v299 = vpack.c.b16 %v298, %v297
      %v308 = vunpack.c.l.b16 %v287
      %v309 = vunpack.c.l.b16 %v288
      %v310 = vunpack.c.l.b16 %v289
      %v311 = vunpack.c.l.b16 %v290
      %v312 = vunpack.c.l.b16 %v291
      %v313 = vunpack.c.l.b16 %v292
      %v314 = vunpack.c.l.b16 %v293
      %v315 = vunpack.c.l.b16 %v294
      %v316 = vpack.c.b16 %v309, %v308
      %v317 = vpack.c.b16 %v311, %v310
      %v318 = vpack.c.b16 %v313, %v312
      %v319 = vpack.c.b16 %v315, %v314
      %vm324 = vcmask 523264
      %v326 = vsel %vm324, %v299, 0
      %328 = vmatprep.subr.bf16.mxu0 0
      %329 = vmatpush1.bf16.msra.mxu0 %v316
      %330 = vmatprep.subr.bf16.mxu0 0
      %331 = vmatpush1.bf16.msra.mxu0 %v317
      %332 = vmatprep.subr.bf16.mxu0 0
      %333 = vmatpush1.bf16.msra.mxu0 %v318
      %334 = vmatprep.subr.bf16.mxu0 0
      %335 = vmatpush1.bf16.msra.mxu0 %v319
      %336 = vmatprep.subr.bf16.mxu0 0
      %337 = vmatpush1.bf16.msra.mxu0 0
      %338 = vmatprep.subr.bf16.mxu0 0
      %339 = vmatpush1.bf16.msra.mxu0 0
      %340 = vmatprep.subr.bf16.mxu0 0
      %341 = vmatpush1.bf16.msra.mxu0 0
      %342 = vmatprep.subr.bf16.mxu0 0
      %343 = vmatpush1.bf16.msra.mxu0 0
      %344 = vmatprep.subr.bf16.mxu0 0
      %345 = vmatpush1.bf16.msra.mxu0 0
      %346 = vmatprep.subr.bf16.mxu0 0
      %347 = vmatpush1.bf16.msra.mxu0 0
      %348 = vmatprep.subr.bf16.mxu0 0
      %349 = vmatpush1.bf16.msra.mxu0 0
      %350 = vmatprep.subr.bf16.mxu0 0
      %351 = vmatpush1.bf16.msra.mxu0 0
      %352 = vmatprep.subr.bf16.mxu0 0
      %353 = vmatpush1.bf16.msra.mxu0 0
      %354 = vmatprep.subr.bf16.mxu0 0
      %355 = vmatpush1.bf16.msra.mxu0 0
      %356 = vmatprep.subr.bf16.mxu0 0
      %357 = vmatpush1.bf16.msra.mxu0 0
      %358 = vmatprep.subr.bf16.mxu0 0
      %359 = vmatpush1.bf16.msra.mxu0 0
      %360 = vmatprep.mubr.bf16.mxu0 0
      %361 = vmatmul.mubr.bf16.gmra.mrb[0].mxu0 %v326
      %v362 = vpop.f32.mrb[0].mxu0
      %v363 = vadd.f32 0.0, %v362
      %v364 = vpop.f32.mrb[0].mxu0
      %v365 = vpop.f32.mrb[0].mxu0
      %v366 = vadd.f32 0.0, %v365
      %v367 = vpop.f32.mrb[0].mxu0
      %368 = vdwg.mxu0
      %v369 = vmul.f32 %v363, 0.125
      %v370 = vmul.f32 %v366, 0.125
      %v371 = vpack.c.bf16 %v370, %v369
      %v373 = vunpack.c.l.b16 %v371
      %v374 = vunpack.c.h.b16 %v371
      %v375 = vpack.c.b16 %v373, %v373
      %v376 = vpack.c.b16 %v374, %v374
      %vm379 = vcmask 125952
      %380 = vst.msk [vmem:[%s262] sm:$0xf] %vm379, %v375
      %381 = vst.msk [vmem:[%s262 + $0x4] sm:$0xf] %vm379, %v376
      %s382 = scalar_lea.vmem %s1, 32
      %v383 = vld [vmem:[%s382] sm:$0xf]
      %v384 = vld [vmem:[%s382 + $0x4] sm:$0xf]
      %v385 = vld [vmem:[%s382 + $0x8] sm:$0xf]
      %v386 = vld [vmem:[%s382 + $0xc] sm:$0xf]
      %v387 = vld [vmem:[%s382 + $0x10] sm:$0xf]
      %v388 = vld [vmem:[%s382 + $0x14] sm:$0xf]
      %v389 = vld [vmem:[%s382 + $0x18] sm:$0xf]
      %v390 = vld [vmem:[%s382 + $0x1c] sm:$0xf]
      %v399 = vunpack.c.l.b16 %v383
      %v400 = vunpack.c.l.b16 %v384
      %v401 = vunpack.c.l.b16 %v385
      %v402 = vunpack.c.l.b16 %v386
      %v403 = vunpack.c.l.b16 %v387
      %v404 = vunpack.c.l.b16 %v388
      %v405 = vunpack.c.l.b16 %v389
      %v406 = vunpack.c.l.b16 %v390
      %v407 = vpack.c.b16 %v400, %v399
      %v408 = vpack.c.b16 %v402, %v401
      %v409 = vpack.c.b16 %v404, %v403
      %v410 = vpack.c.b16 %v406, %v405
      %415 = vmatprep.subr.bf16.mxu0 0
      %416 = vmatpush1.bf16.msra.mxu0 %v407
      %417 = vmatprep.subr.bf16.mxu0 0
      %418 = vmatpush1.bf16.msra.mxu0 %v408
      %419 = vmatprep.subr.bf16.mxu0 0
      %420 = vmatpush1.bf16.msra.mxu0 %v409
      %421 = vmatprep.subr.bf16.mxu0 0
      %422 = vmatpush1.bf16.msra.mxu0 %v410
      %423 = vmatprep.subr.bf16.mxu0 0
      %424 = vmatpush1.bf16.msra.mxu0 0
      %425 = vmatprep.subr.bf16.mxu0 0
      %426 = vmatpush1.bf16.msra.mxu0 0
      %427 = vmatprep.subr.bf16.mxu0 0
      %428 = vmatpush1.bf16.msra.mxu0 0
      %429 = vmatprep.subr.bf16.mxu0 0
      %430 = vmatpush1.bf16.msra.mxu0 0
      %431 = vmatprep.subr.bf16.mxu0 0
      %432 = vmatpush1.bf16.msra.mxu0 0
      %433 = vmatprep.subr.bf16.mxu0 0
      %434 = vmatpush1.bf16.msra.mxu0 0
      %435 = vmatprep.subr.bf16.mxu0 0
      %436 = vmatpush1.bf16.msra.mxu0 0
      %437 = vmatprep.subr.bf16.mxu0 0
      %438 = vmatpush1.bf16.msra.mxu0 0
      %439 = vmatprep.subr.bf16.mxu0 0
      %440 = vmatpush1.bf16.msra.mxu0 0
      %441 = vmatprep.subr.bf16.mxu0 0
      %442 = vmatpush1.bf16.msra.mxu0 0
      %443 = vmatprep.subr.bf16.mxu0 0
      %444 = vmatpush1.bf16.msra.mxu0 0
      %445 = vmatprep.subr.bf16.mxu0 0
      %446 = vmatpush1.bf16.msra.mxu0 0
      %447 = vmatprep.mubr.bf16.mxu0 0
      %448 = vmatmul.mubr.bf16.gmra.mrb[0].mxu0 %v326
      %v449 = vpop.f32.mrb[0].mxu0
      %v450 = vadd.f32 0.0, %v449
      %v451 = vpop.f32.mrb[0].mxu0
      %v452 = vpop.f32.mrb[0].mxu0
      %v453 = vadd.f32 0.0, %v452
      %v454 = vpop.f32.mrb[0].mxu0
      %455 = vdwg.mxu0
      %v456 = vpack.c.bf16 %v453, %v450
      %v458 = vunpack.c.l.b16 %v456
      %v459 = vunpack.c.h.b16 %v456
      %v460 = vpack.c.b16 %v458, %v458
      %v461 = vpack.c.b16 %v459, %v459
      %464 = vst.msk [vmem:[%s272] sm:$0xf] %vm379, %v460
      %465 = vst.msk [vmem:[%s272 + $0x4] sm:$0xf] %vm379, %v461
      %s466 = scalar_lea.vmem %s1, 64
      %v467 = vld [vmem:[%s466] sm:$0xf]
      %v468 = vld [vmem:[%s466 + $0x4] sm:$0xf]
      %v469 = vld [vmem:[%s466 + $0x8] sm:$0xf]
      %v470 = vld [vmem:[%s466 + $0xc] sm:$0xf]
      %v471 = vld [vmem:[%s466 + $0x10] sm:$0xf]
      %v472 = vld [vmem:[%s466 + $0x14] sm:$0xf]
      %v473 = vld [vmem:[%s466 + $0x18] sm:$0xf]
      %v474 = vld [vmem:[%s466 + $0x1c] sm:$0xf]
      %v483 = vunpack.c.l.b16 %v467
      %v484 = vunpack.c.l.b16 %v468
      %v485 = vunpack.c.l.b16 %v469
      %v486 = vunpack.c.l.b16 %v470
      %v487 = vunpack.c.l.b16 %v471
      %v488 = vunpack.c.l.b16 %v472
      %v489 = vunpack.c.l.b16 %v473
      %v490 = vunpack.c.l.b16 %v474
      %v491 = vpack.c.b16 %v484, %v483
      %v492 = vpack.c.b16 %v486, %v485
      %v493 = vpack.c.b16 %v488, %v487
      %v494 = vpack.c.b16 %v490, %v489
      %499 = vmatprep.subr.bf16.mxu0 0
      %500 = vmatpush1.bf16.msra.mxu0 %v491
      %501 = vmatprep.subr.bf16.mxu0 0
      %502 = vmatpush1.bf16.msra.mxu0 %v492
      %503 = vmatprep.subr.bf16.mxu0 0
      %504 = vmatpush1.bf16.msra.mxu0 %v493
      %505 = vmatprep.subr.bf16.mxu0 0
      %506 = vmatpush1.bf16.msra.mxu0 %v494
      %507 = vmatprep.subr.bf16.mxu0 0
      %508 = vmatpush1.bf16.msra.mxu0 0
      %509 = vmatprep.subr.bf16.mxu0 0
      %510 = vmatpush1.bf16.msra.mxu0 0
      %511 = vmatprep.subr.bf16.mxu0 0
      %512 = vmatpush1.bf16.msra.mxu0 0
      %513 = vmatprep.subr.bf16.mxu0 0
      %514 = vmatpush1.bf16.msra.mxu0 0
      %515 = vmatprep.subr.bf16.mxu0 0
      %516 = vmatpush1.bf16.msra.mxu0 0
      %517 = vmatprep.subr.bf16.mxu0 0
      %518 = vmatpush1.bf16.msra.mxu0 0
      %519 = vmatprep.subr.bf16.mxu0 0
      %520 = vmatpush1.bf16.msra.mxu0 0
      %521 = vmatprep.subr.bf16.mxu0 0
      %522 = vmatpush1.bf16.msra.mxu0 0
      %523 = vmatprep.subr.bf16.mxu0 0
      %524 = vmatpush1.bf16.msra.mxu0 0
      %525 = vmatprep.subr.bf16.mxu0 0
      %526 = vmatpush1.bf16.msra.mxu0 0
      %527 = vmatprep.subr.bf16.mxu0 0
      %528 = vmatpush1.bf16.msra.mxu0 0
      %529 = vmatprep.subr.bf16.mxu0 0
      %530 = vmatpush1.bf16.msra.mxu0 0
      %531 = vmatprep.mubr.bf16.mxu0 0
      %532 = vmatmul.mubr.bf16.gmra.mrb[0].mxu0 %v326
      %v533 = vpop.f32.mrb[0].mxu0
      %v534 = vadd.f32 0.0, %v533
      %v535 = vpop.f32.mrb[0].mxu0
      %v536 = vpop.f32.mrb[0].mxu0
      %v537 = vadd.f32 0.0, %v536
      %v538 = vpop.f32.mrb[0].mxu0
      %539 = vdwg.mxu0
      %v540 = vpack.c.bf16 %v537, %v534
      %v542 = vunpack.c.l.b16 %v540
      %v543 = vunpack.c.h.b16 %v540
      %v544 = vpack.c.b16 %v542, %v542
      %v545 = vpack.c.b16 %v543, %v543
      %548 = vst.msk [vmem:[%s282] sm:$0xf] %vm379, %v544
      %549 = vst.msk [vmem:[%s282 + $0x4] sm:$0xf] %vm379, %v545
      %s550 = smul.u32 2, %s21
      %p551 = scmp.lt.s32.totalorder %s20, 1
      %s552 = scalar_select %p551, %s20, 1
      %p553 = scmp.lt.s32.totalorder %s550, 3
      %s554 = scalar_select %p553, %s550, 3
      %s555 = smul.addr %s552, 4
      %s556 = sadd.s32 %s554, %s555
      %s557 = smul.addr %s556, 4
      %s558 = scalar_lea.vmem %s2, %s557
      %s559 = smul.u32 2, %s21
      %p560 = scmp.lt.s32.totalorder %s20, 1
      %s561 = scalar_select %p560, %s20, 1
      %p562 = scmp.lt.s32.totalorder %s559, 3
      %s563 = scalar_select %p562, %s559, 3
      %s564 = smul.addr %s561, 4
      %s565 = sadd.s32 %s563, %s564
      %s566 = smul.addr %s565, 4
      %s567 = scalar_lea.vmem %s3, %s566
      %s568 = smul.u32 2, %s21
      %p569 = scmp.lt.s32.totalorder %s20, 1
      %s570 = scalar_select %p569, %s20, 1
      %p571 = scmp.lt.s32.totalorder %s568, 3
      %s572 = scalar_select %p571, %s568, 3
      %s573 = smul.addr %s570, 4
      %s574 = sadd.s32 %s572, %s573
      %s575 = smul.addr %s574, 4
      %s576 = scalar_lea.vmem %s4, %s575
      // Predicated region
      $region29: #{tpu_custom_call.1} parent=27 // pred_check
        %p577 = pneg %p97
      $region30: #{tpu_custom_call.1} parent=27 // pred_check_branch
        %579 = sbr.rel (%p577) target = $region32
      $region31: #{tpu_custom_call.1} parent=27 // pred_region
        %s580 = smul.u32 2, %s21
      $region32: #{tpu_custom_call.1} parent=27 // pred_fallthru
        _
      // Predicated region
      $region33: #{tpu_custom_call.1} parent=27 // pred_check
        %p581 = pneg %p125
      $region34: #{tpu_custom_call.1} parent=27 // pred_check_branch
        %583 = sbr.rel (%p581) target = $region36
      $region35: #{tpu_custom_call.1} parent=27 // pred_region
        %s584 = smul.u32 2, %s21
      $region36: #{tpu_custom_call.1} parent=27 // pred_fallthru
        _
      // Predicated region
      $region37: #{tpu_custom_call.1} parent=27 // pred_check
        %p585 = pneg %p153
      $region38: #{tpu_custom_call.1} parent=27 // pred_check_branch
        %587 = sbr.rel (%p585) target = $region40
      $region39: #{tpu_custom_call.1} parent=27 // pred_region
        %s588 = smul.u32 2, %s21
      $region40: #{tpu_custom_call.1} parent=27 // pred_fallthru
        _
    $region28: #{tpu_custom_call.1} parent=5 // pred_fallthru
      _
    %p589 = scmp.le.s32.totalorder 2, %s11
    // Predicated region
    $region41: #{tpu_custom_call.1} parent=5 // pred_check
      %p590 = pneg %p589
    $region42: #{tpu_custom_call.1} parent=5 // pred_check_branch
      %592 = sbr.rel (%p590) target = $region44
    $region43: #{tpu_custom_call.1} parent=5 // pred_region
      %s593 = ssub.s32 %s11, 2
      // Predicated region
      $region45: #{tpu_custom_call.1} parent=43 // pred_check
        %p594 = pneg %p103
      $region46: #{tpu_custom_call.1} parent=43 // pred_check_branch
        %596 = sbr.rel (%p594) target = $region48
      $region47: #{tpu_custom_call.1} parent=43 // pred_region
        %s597 = smul.u32 2, %s23
        %p598 = scmp.lt.s32.totalorder %s22, 1
        %s599 = scalar_select %p598, %s22, 1
        %p600 = scmp.lt.s32.totalorder %s597, 3
        %s601 = scalar_select %p600, %s597, 3
        %s602 = smul.addr %s599, 4
        %s603 = sadd.s32 %s601, %s602
        %s604 = smul.addr %s603, 4
        %s605 = scalar_lea.vmem %s2, %s604
      $region48: #{tpu_custom_call.1} parent=43 // pred_fallthru
        _
      // Predicated region
      $region49: #{tpu_custom_call.1} parent=43 // pred_check
        %p606 = pneg %p131
      $region50: #{tpu_custom_call.1} parent=43 // pred_check_branch
        %608 = sbr.rel (%p606) target = $region52
      $region51: #{tpu_custom_call.1} parent=43 // pred_region
        %s609 = smul.u32 2, %s23
        %p610 = scmp.lt.s32.totalorder %s22, 1
        %s611 = scalar_select %p610, %s22, 1
        %p612 = scmp.lt.s32.totalorder %s609, 3
        %s613 = scalar_select %p612, %s609, 3
        %s614 = smul.addr %s611, 4
        %s615 = sadd.s32 %s613, %s614
        %s616 = smul.addr %s615, 4
        %s617 = scalar_lea.vmem %s3, %s616
      $region52: #{tpu_custom_call.1} parent=43 // pred_fallthru
        _
      // Predicated region
      $region53: #{tpu_custom_call.1} parent=43 // pred_check
        %p618 = pneg %p159
      $region54: #{tpu_custom_call.1} parent=43 // pred_check_branch
        %620 = sbr.rel (%p618) target = $region56
      $region55: #{tpu_custom_call.1} parent=43 // pred_region
        %s621 = smul.u32 2, %s23
        %p622 = scmp.lt.s32.totalorder %s22, 1
        %s623 = scalar_select %p622, %s22, 1
        %p624 = scmp.lt.s32.totalorder %s621, 3
        %s625 = scalar_select %p624, %s621, 3
        %s626 = smul.addr %s623, 4
        %s627 = sadd.s32 %s625, %s626
        %s628 = smul.addr %s627, 4
        %s629 = scalar_lea.vmem %s4, %s628
      $region56: #{tpu_custom_call.1} parent=43 // pred_fallthru
        _
    $region44: #{tpu_custom_call.1} parent=5 // pred_fallthru
      _
  $region6: #{tpu_custom_call.1} parent=0 // loop_footer
    %s15 = sadd.s32 1, %s11
  $region7: #{tpu_custom_call.1} parent=0 // loop_footer_branch
    %10 = sbr.rel target = $region3
  $region8: #{tpu_custom_call.1} parent=0 // loop_exit
    _

</llo_original>
